<compile_context>
chip_gen: v5e
topology: v5e:2x2
jax: 0.10.0
libtpu: 0.0.40
codegen_flags: <defaults>
</compile_context>

<pallas_src>
import math

import jax
import jax.numpy as jnp
from jax.experimental import pallas as pl
from jax.experimental.pallas import tpu as pltpu  # noqa: F401  (TPU backend)

LN_EPS = 1e-5


def _activation(name):
    if name == "relu":
        return lambda x: jnp.maximum(x, 0.0)
    if name == "gelu":
        # exact (erf-based) GELU, same as torch.nn.GELU default
        return lambda x: 0.5 * x * (1.0 + jax.lax.erf(x / math.sqrt(2.0)))
    raise ValueError(name)


def _make_kernel(B, T, K, H, activation_function):
    act = _activation(activation_function)
    scale = 1.0 / math.sqrt(K)
    N = B * T
    f32, bf16 = jnp.float32, jnp.bfloat16

    def kernel(x_ref, wq_ref, wk_ref, wv_ref, wu_ref, bu_ref,
               w1_ref, b1_ref, w2_ref, b2_ref,
               ln1w_ref, ln1b_ref, ln2w_ref, ln2b_ref, o_ref):
        x = x_ref[...].astype(f32)                                   # (B, T, K)

        # Head-batched activation layout, n = h*B + b (leading-dim only ops).
        x_hb = jnp.broadcast_to(x.astype(bf16)[None],
                                (H, B, T, K)).reshape(H * B, T, K)   # (H*B,T,K)

        # ---- QKV projections: one batched matmul per projection (bf16 in,
        # f32 accumulate) ----
        q = jnp.einsum("ntk,nkd->ntd", x_hb, wq_ref[...],
                       preferred_element_type=f32)                   # (H*B,T,K)
        k = jnp.einsum("ntk,nkd->ntd", x_hb, wk_ref[...],
                       preferred_element_type=f32)
        v = jnp.einsum("ntk,nkd->ntd", x_hb, wv_ref[...],
                       preferred_element_type=f32)

        # ---- scaled dot-product attention, all (b, h) pairs at once ----
        # contract last dims -> no explicit transpose of K
        s = jnp.einsum("ntk,nsk->nts", q.astype(bf16), k.astype(bf16),
                       preferred_element_type=f32) * scale           # (H*B,T,T)
        s = s - jnp.max(s, axis=-1, keepdims=True)
        p = jnp.exp(s)
        p = p * pl.reciprocal(jnp.sum(p, axis=-1, keepdims=True), approx=True)
        o_h = jnp.einsum("nts,nsk->ntk", p.astype(bf16), v.astype(bf16),
                         preferred_element_type=f32)                 # (H*B,T,K)

        # ---- unify heads: batched projection, then reduce over heads.
        # sum_h out_h @ Wu[h*K:(h+1)*K, :]  ==  concat_h(out_h) @ Wu
        proj = jnp.einsum("ntk,nkd->ntd", o_h.astype(bf16), wu_ref[...],
                          preferred_element_type=f32)                # (H*B,T,K)
        att = proj[0:B]
        for h in range(1, H):           # H-1 full-slab VPU adds (no tiny dots)
            att = att + proj[h * B:(h + 1) * B]
        att = att.reshape(N, K) + bu_ref[...]                        # (N, K)

        # ---- residual + LayerNorm 1 (f32) ----
        y = att + x.reshape(N, K)
        mu = jnp.mean(y, axis=-1, keepdims=True)
        var = jnp.mean(jnp.square(y - mu), axis=-1, keepdims=True)
        y = (y - mu) * jax.lax.rsqrt(var + LN_EPS) * ln1w_ref[...] + ln1b_ref[...]

        # ---- feed-forward over all B*T rows (wide matmuls) ----
        h1 = jnp.dot(y.astype(bf16), w1_ref[...],
                     preferred_element_type=f32) + b1_ref[...]       # (N, F)
        h1 = act(h1)
        ff = jnp.dot(h1.astype(bf16), w2_ref[...],
                     preferred_element_type=f32) + b2_ref[...]       # (N, K)
        # TODO(synk): nn.Dropout is identity in eval mode; training-mode dropout not implemented.

        # ---- residual + LayerNorm 2 (f32) ----
        z = ff + y
        mu2 = jnp.mean(z, axis=-1, keepdims=True)
        var2 = jnp.mean(jnp.square(z - mu2), axis=-1, keepdims=True)
        z = (z - mu2) * jax.lax.rsqrt(var2 + LN_EPS) * ln2w_ref[...] + ln2b_ref[...]

        o_ref[...] = z.reshape(B, T, K).astype(o_ref.dtype)

    return kernel


def _per_head_stack(w, H, K):
    """(K, H*K) -> (H, K, K): slab h is W[:, h*K:(h+1)*K]."""
    return jnp.transpose(w.reshape(K, H, K), (1, 0, 2))


def transformer_block(x, params, *, num_heads, activation_function):
    """x: (B, T, K) float32.  Returns (B, T, K) float32."""
    B, T, K = x.shape
    H = num_heads
    bf16 = jnp.bfloat16

    # Restack projection weights per head on the leading axis and replicate over
    # batch (n = h*B + b) so the kernel's batched einsums need no lane-dim
    # reshapes/slices.  The B-fold weight duplication is a few KB at these
    # shapes; for large B one would reshape activations per head in-kernel
    # instead.
    wq = jnp.repeat(_per_head_stack(params["wq"], H, K), B, axis=0).astype(bf16)
    wk = jnp.repeat(_per_head_stack(params["wk"], H, K), B, axis=0).astype(bf16)
    wv = jnp.repeat(_per_head_stack(params["wv"], H, K), B, axis=0).astype(bf16)
    wu = jnp.repeat(params["wu"].reshape(H, K, K), B, axis=0).astype(bf16)

    kernel = _make_kernel(B, T, K, H, activation_function)
    fn = pl.pallas_call(
        kernel,
        out_shape=jax.ShapeDtypeStruct((B, T, K), jnp.float32),
        # no grid: single fused step, whole arrays as VMEM blocks
    )
    return fn(x,
              wq, wk, wv, wu, params["bu"],
              params["w1"].astype(bf16), params["b1"],
              params["w2"].astype(bf16), params["b2"],
              params["ln1_w"], params["ln1_b"],
              params["ln2_w"], params["ln2_b"])


def reference_block(x, params, *, num_heads, activation_function,
                    round_bf16=False):
    """Pure-JAX reference mirroring the PyTorch forward (eval mode).

    round_bf16=True mirrors the kernel's bf16 MXU operands (f32 accumulation)
    for a tight check; round_bf16=False is exact f32 PyTorch semantics.
    """
    act = _activation(activation_function)
    B, T, K = x.shape
    H = num_heads
    scale = 1.0 / math.sqrt(K)
    PH = jax.lax.Precision.HIGHEST
    if round_bf16:
        r = lambda a: a.astype(jnp.bfloat16).astype(jnp.float32)
    else:
        r = lambda a: a

    q = jnp.matmul(r(x), r(params["wq"]), precision=PH)   # (B, T, H*K)
    k = jnp.matmul(r(x), r(params["wk"]), precision=PH)
    v = jnp.matmul(r(x), r(params["wv"]), precision=PH)
    q = q.reshape(B, T, H, K).transpose(0, 2, 1, 3)
    k = k.reshape(B, T, H, K).transpose(0, 2, 1, 3)
    v = v.reshape(B, T, H, K).transpose(0, 2, 1, 3)
    dot = jnp.einsum("bhtk,bhsk->bhts", r(q), r(k), precision=PH) * scale
    p = jax.nn.softmax(dot, axis=-1)
    out = jnp.einsum("bhts,bhsk->bhtk", r(p), r(v), precision=PH)
    out = out.transpose(0, 2, 1, 3).reshape(B, T, H * K)
    att = jnp.matmul(r(out), r(params["wu"]), precision=PH) + params["bu"][0]

    def ln(y, w, b):
        mu = jnp.mean(y, axis=-1, keepdims=True)
        var = jnp.mean((y - mu) ** 2, axis=-1, keepdims=True)
        return (y - mu) * jax.lax.rsqrt(var + LN_EPS) * w[0] + b[0]

    y = ln(att + x, params["ln1_w"], params["ln1_b"])
    hdn = act(jnp.matmul(r(y), r(params["w1"]), precision=PH) + params["b1"][0])
    ff = jnp.matmul(r(hdn), r(params["w2"]), precision=PH) + params["b2"][0]
    return ln(ff + y, params["ln2_w"], params["ln2_b"])


def init_params(key, k_dim, num_heads, ff_dim):
    H, K, F = num_heads, k_dim, ff_dim
    ks = jax.random.split(key, 12)
    s = 0.1
    return {
        # Linear weights stored pre-transposed as (in, out) so y = x @ W
        "wq": jax.random.normal(ks[0], (K, H * K), jnp.float32) * s,
        "wk": jax.random.normal(ks[1], (K, H * K), jnp.float32) * s,
        "wv": jax.random.normal(ks[2], (K, H * K), jnp.float32) * s,
        "wu": jax.random.normal(ks[3], (H * K, K), jnp.float32) * s,
        "bu": jax.random.normal(ks[4], (1, K), jnp.float32) * s,
        "w1": jax.random.normal(ks[5], (K, F), jnp.float32) * s,
        "b1": jax.random.normal(ks[6], (1, F), jnp.float32) * s,
        "w2": jax.random.normal(ks[7], (F, K), jnp.float32) * s,
        "b2": jax.random.normal(ks[8], (1, K), jnp.float32) * s,
        "ln1_w": 1.0 + jax.random.normal(ks[9], (1, K), jnp.float32) * s,
        "ln1_b": jax.random.normal(ks[10], (1, K), jnp.float32) * s,
        "ln2_w": 1.0 + jax.random.normal(ks[11], (1, K), jnp.float32) * s,
        "ln2_b": jnp.zeros((1, K), jnp.float32),
    }


if __name__ == "__main__":
    B, T, K = 2, 8, 32          # batch, seq, embedding_dimension
    H = 2                        # num_heads
    FF = 64                      # feedforward_connections (> K)
    ACT = "gelu"                 # activation_function
    # dropout_probability irrelevant in eval mode (identity)

    key = jax.random.PRNGKey(0)
    kx, kp = jax.random.split(key)
    x = jax.random.normal(kx, (B, T, K), jnp.float32)
    params = init_params(kp, K, H, FF)

    out = transformer_block(x, params, num_heads=H, activation_function=ACT)
    out = jax.block_until_ready(out)
    assert out.shape == (B, T, K)

    # Tight check: reference with the same bf16 operand rounding the kernel uses
    # (tolerance covers pl.reciprocal(approx=True) + accumulation order).
    ref_mirror = reference_block(x, params, num_heads=H,
                                 activation_function=ACT, round_bf16=True)
    assert jnp.allclose(out, ref_mirror, atol=1e-2, rtol=1e-2), (
        f"mirror max abs err {jnp.max(jnp.abs(out - ref_mirror))}")

    # Semantic check vs. exact f32 PyTorch-equivalent math (tolerance covers the
    # intentional bf16 MXU operands with f32 accumulation).
    ref_f32 = reference_block(x, params, num_heads=H,
                              activation_function=ACT, round_bf16=False)
    assert jnp.allclose(out, ref_f32, atol=5e-2, rtol=5e-2), (
        f"f32 max abs err {jnp.max(jnp.abs(out - ref_f32))}")

    print("KERNEL_OK")
</pallas_src>

<mosaic_0001>
module attributes {stable_mosaic.version = 11 : i64} {
  func.func @kernel(%arg0: memref<2x8x32xf32, #tpu.memory_space<vmem>>, %arg1: memref<4x32x32xbf16, #tpu.memory_space<vmem>>, %arg2: memref<4x32x32xbf16, #tpu.memory_space<vmem>>, %arg3: memref<4x32x32xbf16, #tpu.memory_space<vmem>>, %arg4: memref<4x32x32xbf16, #tpu.memory_space<vmem>>, %arg5: memref<1x32xf32, #tpu.memory_space<vmem>>, %arg6: memref<32x64xbf16, #tpu.memory_space<vmem>>, %arg7: memref<1x64xf32, #tpu.memory_space<vmem>>, %arg8: memref<64x32xbf16, #tpu.memory_space<vmem>>, %arg9: memref<1x32xf32, #tpu.memory_space<vmem>>, %arg10: memref<1x32xf32, #tpu.memory_space<vmem>>, %arg11: memref<1x32xf32, #tpu.memory_space<vmem>>, %arg12: memref<1x32xf32, #tpu.memory_space<vmem>>, %arg13: memref<1x32xf32, #tpu.memory_space<vmem>>, %arg14: memref<2x8x32xf32, #tpu.memory_space<vmem>>) attributes {dimension_semantics = [], scalar_prefetch = 0 : i64, scratch_operands = 0 : i64, tpu.core_type = #tpu.core_type<tc>} {
    %c0 = arith.constant 0 : index
    %c0_0 = arith.constant 0 : index
    %c0_1 = arith.constant 0 : index
    %0 = vector.load %arg0[%c0, %c0_0, %c0_1] : memref<2x8x32xf32, #tpu.memory_space<vmem>>, vector<2x8x32xf32>
    %1 = arith.truncf %0 : vector<2x8x32xf32> to vector<2x8x32xbf16>
    %2 = vector.shape_cast %1 : vector<2x8x32xbf16> to vector<1x2x8x32xbf16>
    %3 = vector.shape_cast %2 : vector<1x2x8x32xbf16> to vector<1x2x8x32xbf16>
    %4 = vector.broadcast %3 : vector<1x2x8x32xbf16> to vector<2x2x8x32xbf16>
    %5 = vector.shape_cast %4 : vector<2x2x8x32xbf16> to vector<4x8x32xbf16>
    %c0_2 = arith.constant 0 : index
    %c0_3 = arith.constant 0 : index
    %c0_4 = arith.constant 0 : index
    %6 = vector.load %arg1[%c0_2, %c0_3, %c0_4] : memref<4x32x32xbf16, #tpu.memory_space<vmem>>, vector<4x32x32xbf16>
    "tpu.trace_start"() <{level = 10 : i32, message = "ntk,nkd->ntd"}> : () -> ()
    %cst = arith.constant dense<0.000000e+00> : vector<4x8x32xf32>
    %7 = tpu.matmul %5, %6, %cst {dimension_numbers = #tpu.dot_dimension_numbers<[2], [1], [1], [2], [0, 0, 0, 1, 1, 2], [0], [0]>} : vector<4x8x32xbf16>, vector<4x32x32xbf16>, vector<4x8x32xf32> -> vector<4x8x32xf32>
    "tpu.trace_stop"() : () -> ()
    %c0_5 = arith.constant 0 : index
    %c0_6 = arith.constant 0 : index
    %c0_7 = arith.constant 0 : index
    %8 = vector.load %arg2[%c0_5, %c0_6, %c0_7] : memref<4x32x32xbf16, #tpu.memory_space<vmem>>, vector<4x32x32xbf16>
    "tpu.trace_start"() <{level = 10 : i32, message = "ntk,nkd->ntd"}> : () -> ()
    %cst_8 = arith.constant dense<0.000000e+00> : vector<4x8x32xf32>
    %9 = tpu.matmul %5, %8, %cst_8 {dimension_numbers = #tpu.dot_dimension_numbers<[2], [1], [1], [2], [0, 0, 0, 1, 1, 2], [0], [0]>} : vector<4x8x32xbf16>, vector<4x32x32xbf16>, vector<4x8x32xf32> -> vector<4x8x32xf32>
    "tpu.trace_stop"() : () -> ()
    %c0_9 = arith.constant 0 : index
    %c0_10 = arith.constant 0 : index
    %c0_11 = arith.constant 0 : index
    %10 = vector.load %arg3[%c0_9, %c0_10, %c0_11] : memref<4x32x32xbf16, #tpu.memory_space<vmem>>, vector<4x32x32xbf16>
    "tpu.trace_start"() <{level = 10 : i32, message = "ntk,nkd->ntd"}> : () -> ()
    %cst_12 = arith.constant dense<0.000000e+00> : vector<4x8x32xf32>
    %11 = tpu.matmul %5, %10, %cst_12 {dimension_numbers = #tpu.dot_dimension_numbers<[2], [1], [1], [2], [0, 0, 0, 1, 1, 2], [0], [0]>} : vector<4x8x32xbf16>, vector<4x32x32xbf16>, vector<4x8x32xf32> -> vector<4x8x32xf32>
    "tpu.trace_stop"() : () -> ()
    %12 = arith.truncf %7 : vector<4x8x32xf32> to vector<4x8x32xbf16>
    %13 = arith.truncf %9 : vector<4x8x32xf32> to vector<4x8x32xbf16>
    "tpu.trace_start"() <{level = 10 : i32, message = "ntk,nsk->nts"}> : () -> ()
    %cst_13 = arith.constant dense<0.000000e+00> : vector<4x8x8xf32>
    %14 = tpu.matmul %12, %13, %cst_13 {dimension_numbers = #tpu.dot_dimension_numbers<[2], [2], [1], [1], [0, 0, 0, 1, 1, 1], [0], [0]>} : vector<4x8x32xbf16>, vector<4x8x32xbf16>, vector<4x8x8xf32> -> vector<4x8x8xf32>
    "tpu.trace_stop"() : () -> ()
    %cst_14 = arith.constant 0.176776692 : f32
    %15 = vector.broadcast %cst_14 : f32 to vector<4x8x8xf32>
    %16 = arith.mulf %14, %15 : vector<4x8x8xf32>
    %cst_15 = arith.constant dense<0xFF800000> : vector<4x8xf32>
    %17 = vector.multi_reduction <maximumf>, %16, %cst_15 [2] : vector<4x8x8xf32> to vector<4x8xf32>
    %18 = vector.shape_cast %17 : vector<4x8xf32> to vector<4x8x1xf32>
    %19 = vector.broadcast %18 : vector<4x8x1xf32> to vector<4x8x8xf32>
    %20 = arith.subf %16, %19 : vector<4x8x8xf32>
    %21 = math.exp %20 : vector<4x8x8xf32>
    %cst_16 = arith.constant dense<0.000000e+00> : vector<4x8xf32>
    %22 = vector.multi_reduction <add>, %21, %cst_16 [2] : vector<4x8x8xf32> to vector<4x8xf32>
    %23 = vector.shape_cast %22 : vector<4x8xf32> to vector<4x8x1xf32>
    %24 = tpu.reciprocal %23 {approx = true} : vector<4x8x1xf32> -> vector<4x8x1xf32>
    %25 = vector.broadcast %24 : vector<4x8x1xf32> to vector<4x8x8xf32>
    %26 = arith.mulf %21, %25 : vector<4x8x8xf32>
    %27 = arith.truncf %26 : vector<4x8x8xf32> to vector<4x8x8xbf16>
    %28 = arith.truncf %11 : vector<4x8x32xf32> to vector<4x8x32xbf16>
    "tpu.trace_start"() <{level = 10 : i32, message = "nts,nsk->ntk"}> : () -> ()
    %cst_17 = arith.constant dense<0.000000e+00> : vector<4x8x32xf32>
    %29 = tpu.matmul %27, %28, %cst_17 {dimension_numbers = #tpu.dot_dimension_numbers<[2], [1], [1], [2], [0, 0, 0, 1, 1, 2], [0], [0]>} : vector<4x8x8xbf16>, vector<4x8x32xbf16>, vector<4x8x32xf32> -> vector<4x8x32xf32>
    "tpu.trace_stop"() : () -> ()
    %30 = arith.truncf %29 : vector<4x8x32xf32> to vector<4x8x32xbf16>
    %c0_18 = arith.constant 0 : index
    %c0_19 = arith.constant 0 : index
    %c0_20 = arith.constant 0 : index
    %31 = vector.load %arg4[%c0_18, %c0_19, %c0_20] : memref<4x32x32xbf16, #tpu.memory_space<vmem>>, vector<4x32x32xbf16>
    "tpu.trace_start"() <{level = 10 : i32, message = "ntk,nkd->ntd"}> : () -> ()
    %cst_21 = arith.constant dense<0.000000e+00> : vector<4x8x32xf32>
    %32 = tpu.matmul %30, %31, %cst_21 {dimension_numbers = #tpu.dot_dimension_numbers<[2], [1], [1], [2], [0, 0, 0, 1, 1, 2], [0], [0]>} : vector<4x8x32xbf16>, vector<4x32x32xbf16>, vector<4x8x32xf32> -> vector<4x8x32xf32>
    "tpu.trace_stop"() : () -> ()
    %33 = vector.extract_strided_slice %32 {offsets = [0, 0, 0], sizes = [2, 8, 32], strides = [1, 1, 1]} : vector<4x8x32xf32> to vector<2x8x32xf32>
    %34 = vector.extract_strided_slice %32 {offsets = [2, 0, 0], sizes = [2, 8, 32], strides = [1, 1, 1]} : vector<4x8x32xf32> to vector<2x8x32xf32>
    %35 = arith.addf %33, %34 : vector<2x8x32xf32>
    %36 = vector.shape_cast %35 : vector<2x8x32xf32> to vector<16x32xf32>
    %c0_22 = arith.constant 0 : index
    %c0_23 = arith.constant 0 : index
    %37 = vector.load %arg5[%c0_22, %c0_23] : memref<1x32xf32, #tpu.memory_space<vmem>>, vector<1x32xf32>
    %38 = vector.broadcast %37 : vector<1x32xf32> to vector<16x32xf32>
    %39 = arith.addf %36, %38 : vector<16x32xf32>
    %40 = vector.shape_cast %0 : vector<2x8x32xf32> to vector<16x32xf32>
    %41 = arith.addf %39, %40 : vector<16x32xf32>
    %cst_24 = arith.constant dense<0.000000e+00> : vector<16xf32>
    %42 = vector.multi_reduction <add>, %41, %cst_24 [1] : vector<16x32xf32> to vector<16xf32>
    %43 = vector.shape_cast %42 : vector<16xf32> to vector<16x1xf32>
    %cst_25 = arith.constant 3.200000e+01 : f32
    %44 = vector.broadcast %cst_25 : f32 to vector<16x1xf32>
    %45 = arith.divf %43, %44 : vector<16x1xf32>
    %46 = vector.broadcast %45 : vector<16x1xf32> to vector<16x32xf32>
    %47 = arith.subf %41, %46 : vector<16x32xf32>
    %48 = arith.mulf %47, %47 : vector<16x32xf32>
    %cst_26 = arith.constant dense<0.000000e+00> : vector<16xf32>
    %49 = vector.multi_reduction <add>, %48, %cst_26 [1] : vector<16x32xf32> to vector<16xf32>
    %50 = vector.shape_cast %49 : vector<16xf32> to vector<16x1xf32>
    %cst_27 = arith.constant 3.200000e+01 : f32
    %51 = vector.broadcast %cst_27 : f32 to vector<16x1xf32>
    %52 = arith.divf %50, %51 : vector<16x1xf32>
    %53 = vector.broadcast %45 : vector<16x1xf32> to vector<16x32xf32>
    %54 = arith.subf %41, %53 : vector<16x32xf32>
    %cst_28 = arith.constant 9.99999974E-6 : f32
    %55 = vector.broadcast %cst_28 : f32 to vector<16x1xf32>
    %56 = arith.addf %52, %55 : vector<16x1xf32>
    %57 = math.rsqrt %56 : vector<16x1xf32>
    %58 = vector.broadcast %57 : vector<16x1xf32> to vector<16x32xf32>
    %59 = arith.mulf %54, %58 : vector<16x32xf32>
    %c0_29 = arith.constant 0 : index
    %c0_30 = arith.constant 0 : index
    %60 = vector.load %arg10[%c0_29, %c0_30] : memref<1x32xf32, #tpu.memory_space<vmem>>, vector<1x32xf32>
    %61 = vector.broadcast %60 : vector<1x32xf32> to vector<16x32xf32>
    %62 = arith.mulf %59, %61 : vector<16x32xf32>
    %c0_31 = arith.constant 0 : index
    %c0_32 = arith.constant 0 : index
    %63 = vector.load %arg11[%c0_31, %c0_32] : memref<1x32xf32, #tpu.memory_space<vmem>>, vector<1x32xf32>
    %64 = vector.broadcast %63 : vector<1x32xf32> to vector<16x32xf32>
    %65 = arith.addf %62, %64 : vector<16x32xf32>
    %66 = arith.truncf %65 : vector<16x32xf32> to vector<16x32xbf16>
    %c0_33 = arith.constant 0 : index
    %c0_34 = arith.constant 0 : index
    %67 = vector.load %arg6[%c0_33, %c0_34] : memref<32x64xbf16, #tpu.memory_space<vmem>>, vector<32x64xbf16>
    %cst_35 = arith.constant dense<0.000000e+00> : vector<16x64xf32>
    %68 = tpu.matmul %66, %67, %cst_35 {dimension_numbers = #tpu.dot_dimension_numbers<[1], [0], [0], [1], [0, 0, 1, 1], [], []>} : vector<16x32xbf16>, vector<32x64xbf16>, vector<16x64xf32> -> vector<16x64xf32>
    %c0_36 = arith.constant 0 : index
    %c0_37 = arith.constant 0 : index
    %69 = vector.load %arg7[%c0_36, %c0_37] : memref<1x64xf32, #tpu.memory_space<vmem>>, vector<1x64xf32>
    %70 = vector.broadcast %69 : vector<1x64xf32> to vector<16x64xf32>
    %71 = arith.addf %68, %70 : vector<16x64xf32>
    %cst_38 = arith.constant 5.000000e-01 : f32
    %72 = vector.broadcast %cst_38 : f32 to vector<16x64xf32>
    %73 = arith.mulf %72, %71 : vector<16x64xf32>
    %cst_39 = arith.constant 1.41421354 : f32
    %74 = vector.broadcast %cst_39 : f32 to vector<16x64xf32>
    %75 = arith.divf %71, %74 : vector<16x64xf32>
    %76 = math.erf %75 : vector<16x64xf32>
    %cst_40 = arith.constant 1.000000e+00 : f32
    %77 = vector.broadcast %cst_40 : f32 to vector<16x64xf32>
    %78 = arith.addf %77, %76 : vector<16x64xf32>
    %79 = arith.mulf %73, %78 : vector<16x64xf32>
    %80 = arith.truncf %79 : vector<16x64xf32> to vector<16x64xbf16>
    %c0_41 = arith.constant 0 : index
    %c0_42 = arith.constant 0 : index
    %81 = vector.load %arg8[%c0_41, %c0_42] : memref<64x32xbf16, #tpu.memory_space<vmem>>, vector<64x32xbf16>
    %cst_43 = arith.constant dense<0.000000e+00> : vector<16x32xf32>
    %82 = tpu.matmul %80, %81, %cst_43 {dimension_numbers = #tpu.dot_dimension_numbers<[1], [0], [0], [1], [0, 0, 1, 1], [], []>} : vector<16x64xbf16>, vector<64x32xbf16>, vector<16x32xf32> -> vector<16x32xf32>
    %c0_44 = arith.constant 0 : index
    %c0_45 = arith.constant 0 : index
    %83 = vector.load %arg9[%c0_44, %c0_45] : memref<1x32xf32, #tpu.memory_space<vmem>>, vector<1x32xf32>
    %84 = vector.broadcast %83 : vector<1x32xf32> to vector<16x32xf32>
    %85 = arith.addf %82, %84 : vector<16x32xf32>
    %86 = arith.addf %85, %65 : vector<16x32xf32>
    %cst_46 = arith.constant dense<0.000000e+00> : vector<16xf32>
    %87 = vector.multi_reduction <add>, %86, %cst_46 [1] : vector<16x32xf32> to vector<16xf32>
    %88 = vector.shape_cast %87 : vector<16xf32> to vector<16x1xf32>
    %cst_47 = arith.constant 3.200000e+01 : f32
    %89 = vector.broadcast %cst_47 : f32 to vector<16x1xf32>
    %90 = arith.divf %88, %89 : vector<16x1xf32>
    %91 = vector.broadcast %90 : vector<16x1xf32> to vector<16x32xf32>
    %92 = arith.subf %86, %91 : vector<16x32xf32>
    %93 = arith.mulf %92, %92 : vector<16x32xf32>
    %cst_48 = arith.constant dense<0.000000e+00> : vector<16xf32>
    %94 = vector.multi_reduction <add>, %93, %cst_48 [1] : vector<16x32xf32> to vector<16xf32>
    %95 = vector.shape_cast %94 : vector<16xf32> to vector<16x1xf32>
    %cst_49 = arith.constant 3.200000e+01 : f32
    %96 = vector.broadcast %cst_49 : f32 to vector<16x1xf32>
    %97 = arith.divf %95, %96 : vector<16x1xf32>
    %98 = vector.broadcast %90 : vector<16x1xf32> to vector<16x32xf32>
    %99 = arith.subf %86, %98 : vector<16x32xf32>
    %cst_50 = arith.constant 9.99999974E-6 : f32
    %100 = vector.broadcast %cst_50 : f32 to vector<16x1xf32>
    %101 = arith.addf %97, %100 : vector<16x1xf32>
    %102 = math.rsqrt %101 : vector<16x1xf32>
    %103 = vector.broadcast %102 : vector<16x1xf32> to vector<16x32xf32>
    %104 = arith.mulf %99, %103 : vector<16x32xf32>
    %c0_51 = arith.constant 0 : index
    %c0_52 = arith.constant 0 : index
    %105 = vector.load %arg12[%c0_51, %c0_52] : memref<1x32xf32, #tpu.memory_space<vmem>>, vector<1x32xf32>
    %106 = vector.broadcast %105 : vector<1x32xf32> to vector<16x32xf32>
    %107 = arith.mulf %104, %106 : vector<16x32xf32>
    %c0_53 = arith.constant 0 : index
    %c0_54 = arith.constant 0 : index
    %108 = vector.load %arg13[%c0_53, %c0_54] : memref<1x32xf32, #tpu.memory_space<vmem>>, vector<1x32xf32>
    %109 = vector.broadcast %108 : vector<1x32xf32> to vector<16x32xf32>
    %110 = arith.addf %107, %109 : vector<16x32xf32>
    %111 = vector.shape_cast %110 : vector<16x32xf32> to vector<2x8x32xf32>
    %c0_55 = arith.constant 0 : index
    %c0_56 = arith.constant 0 : index
    %c0_57 = arith.constant 0 : index
    %112 = vector.load %arg14[%c0_55, %c0_56, %c0_57] : memref<2x8x32xf32, #tpu.memory_space<vmem>>, vector<2x8x32xf32>
    tpu.vector_store %arg14[%c0_55, %c0_56, %c0_57], %111 {strides = array<i32>} : memref<2x8x32xf32, #tpu.memory_space<vmem>>, vector<2x8x32xf32>,
    return
  }
}

</mosaic_0001>

<llo_original>
// kernel: tpu_custom_call.1
$region0: #{tpu_custom_call.1}
  #allocation0 [shape = 'u32[]', space=smem, size = 0x4, offset = 0x4, fixed_abs, tag = 'smem constant byte address 0x4 - core index']
  #allocation1 [shape = 'u32[72,128]{1,0:T(1,128)}', space=vmem, size = 0x9000, scoped, tag = 'internal scratch']
  %s0 = inlined_call_operand.vmem [shape: f32[2,8,32], index: 0, kind: input, shape index: {}]
  %s1 = inlined_call_operand.hbm [shape: bf16[4,32,32], index: 1, kind: input, shape index: {}]
  %s2 = inlined_call_operand.hbm [shape: bf16[4,32,32], index: 2, kind: input, shape index: {}]
  %s3 = inlined_call_operand.hbm [shape: bf16[4,32,32], index: 3, kind: input, shape index: {}]
  %s4 = inlined_call_operand.hbm [shape: bf16[4,32,32], index: 4, kind: input, shape index: {}]
  %s5 = inlined_call_operand.vmem [shape: f32[1,32], index: 5, kind: input, shape index: {}]
  %s6 = inlined_call_operand.vmem [shape: bf16[32,64], index: 6, kind: input, shape index: {}]
  %s7 = inlined_call_operand.vmem [shape: f32[1,64], index: 7, kind: input, shape index: {}]
  %s8 = inlined_call_operand.vmem [shape: bf16[64,32], index: 8, kind: input, shape index: {}]
  %s9 = inlined_call_operand.vmem [shape: f32[1,32], index: 9, kind: input, shape index: {}]
  %s10 = inlined_call_operand.vmem [shape: f32[1,32], index: 10, kind: input, shape index: {}]
  %s11 = inlined_call_operand.vmem [shape: f32[1,32], index: 11, kind: input, shape index: {}]
  %s12 = inlined_call_operand.vmem [shape: f32[1,32], index: 12, kind: input, shape index: {}]
  %s13 = inlined_call_operand.vmem [shape: f32[1,32], index: 13, kind: input, shape index: {}]
  %s14 = inlined_call_operand.hbm [shape: f32[2,8,32], index: 14, kind: output, shape index: {}]
  %s15 = sld [smem:[#allocation0]]
  $region82: #{tpu_custom_call.1} parent=0
    _
  %s17 = ssub.s32 1, %s15
  %s18 = scalar_select 0, %s17, %s15
  $region1: #{tpu_custom_call.1} parent=0
    #allocation2 [shape = 'u8[32768]{0}', space=vmem, size = 0x8000, scoped, tag = 'input window, operand 1, single buffered']
    #allocation3 [shape = 's32[1]{0}', space=sflag, size = 0x4, scoped, tag = 'scoped memory for tpu_custom_call.1']
    #allocation4 [shape = 's32[1]{0}', space=sflag, size = 0x4, scoped, tag = 'scoped memory for tpu_custom_call.1']
    #allocation5 [shape = 'u8[32768]{0}', space=vmem, size = 0x8000, scoped, tag = 'input window, operand 2, single buffered']
    #allocation6 [shape = 's32[1]{0}', space=sflag, size = 0x4, scoped, tag = 'scoped memory for tpu_custom_call.1']
    #allocation7 [shape = 'u8[32768]{0}', space=vmem, size = 0x8000, scoped, tag = 'input window, operand 3, single buffered']
    #allocation8 [shape = 'u8[32768]{0}', space=vmem, size = 0x8000, scoped, tag = 'input window, operand 4, single buffered']
    #allocation9 [shape = 's32[1]{0}', space=sflag, size = 0x4, scoped, tag = 'scoped memory for tpu_custom_call.1']
    #allocation10 [shape = 'u8[8192]{0}', space=vmem, size = 0x2000, scoped, tag = 'output window, operand 0, single buffered']
    %19 = vsyncpa [#allocation3], 0
    %20 = vsyncpa [#allocation6], 0
    %21 = vsyncpa [#allocation9], 0
    %22 = vsyncpa [#allocation4], 0
    // Predicated region
    $region2: #{tpu_custom_call.1} parent=1 // pred_check
      _
    $region3: #{tpu_custom_call.1} parent=1 // pred_check_branch
      %24 = sbr.rel (0) target = $region5
    $region4: #{tpu_custom_call.1} parent=1 // pred_region
      _
    $region5: #{tpu_custom_call.1} parent=1 // pred_fallthru
      _
    // Predicated region
    $region6: #{tpu_custom_call.1} parent=1 // pred_check
      _
    $region7: #{tpu_custom_call.1} parent=1 // pred_check_branch
      %26 = sbr.rel (0) target = $region9
    $region8: #{tpu_custom_call.1} parent=1 // pred_region
      %28 = vsyncadd [#allocation3], 0
      %s29 = sshll.u32 %s1, 4
      %s30 = int_to_ptr.hbm [resolvable:$true] %s29
      %s31 = sshll.u32 [#allocation2], 4
      %s32 = int_to_ptr.vmem [resolvable:$true] %s31
      %37 = dma.hbm_to_vmem [thread:$0]  %s30, 1024, %s32, [#allocation3], 64, 64, 4
    $region9: #{tpu_custom_call.1} parent=1 // pred_fallthru
      _
    // Predicated region
    $region10: #{tpu_custom_call.1} parent=1 // pred_check
      _
    $region11: #{tpu_custom_call.1} parent=1 // pred_check_branch
      %39 = sbr.rel (0) target = $region13
    $region12: #{tpu_custom_call.1} parent=1 // pred_region
      %41 = vsyncadd [#allocation6], 0
      %s42 = sshll.u32 %s2, 4
      %s43 = int_to_ptr.hbm [resolvable:$true] %s42
      %s44 = sshll.u32 [#allocation5], 4
      %s45 = int_to_ptr.vmem [resolvable:$true] %s44
      %50 = dma.hbm_to_vmem [thread:$0]  %s43, 1024, %s45, [#allocation6], 64, 64, 4
    $region13: #{tpu_custom_call.1} parent=1 // pred_fallthru
      _
    // Predicated region
    $region14: #{tpu_custom_call.1} parent=1 // pred_check
      _
    $region15: #{tpu_custom_call.1} parent=1 // pred_check_branch
      %52 = sbr.rel (0) target = $region17
    $region16: #{tpu_custom_call.1} parent=1 // pred_region
      %54 = vsyncadd [#allocation6], 0
      %s55 = sshll.u32 %s3, 4
      %s56 = int_to_ptr.hbm [resolvable:$true] %s55
      %s57 = sshll.u32 [#allocation7], 4
      %s58 = int_to_ptr.vmem [resolvable:$true] %s57
      %63 = dma.hbm_to_vmem [thread:$0]  %s56, 1024, %s58, [#allocation6], 64, 64, 4
    $region17: #{tpu_custom_call.1} parent=1 // pred_fallthru
      _
    // Predicated region
    $region18: #{tpu_custom_call.1} parent=1 // pred_check
      _
    $region19: #{tpu_custom_call.1} parent=1 // pred_check_branch
      %65 = sbr.rel (0) target = $region21
    $region20: #{tpu_custom_call.1} parent=1 // pred_region
      %67 = vsyncadd [#allocation9], 0
      %s68 = sshll.u32 %s4, 4
      %s69 = int_to_ptr.hbm [resolvable:$true] %s68
      %s70 = sshll.u32 [#allocation8], 4
      %s71 = int_to_ptr.vmem [resolvable:$true] %s70
      %76 = dma.hbm_to_vmem [thread:$0]  %s69, 1024, %s71, [#allocation9], 64, 64, 4
    $region21: #{tpu_custom_call.1} parent=1 // pred_fallthru
      _
    // Predicated region
    $region22: #{tpu_custom_call.1} parent=1 // pred_check
      _
    $region23: #{tpu_custom_call.1} parent=1 // pred_check_branch
      %78 = sbr.rel (0) target = $region25
    $region24: #{tpu_custom_call.1} parent=1 // pred_region
      _
    $region25: #{tpu_custom_call.1} parent=1 // pred_fallthru
      _
    // Predicated region
    $region26: #{tpu_custom_call.1} parent=1 // pred_check
      _
    $region27: #{tpu_custom_call.1} parent=1 // pred_check_branch
      %80 = sbr.rel (0) target = $region29
    $region28: #{tpu_custom_call.1} parent=1 // pred_region
      _
    $region29: #{tpu_custom_call.1} parent=1 // pred_fallthru
      _
    // Predicated region
    $region30: #{tpu_custom_call.1} parent=1 // pred_check
      _
    $region31: #{tpu_custom_call.1} parent=1 // pred_check_branch
      %82 = sbr.rel (0) target = $region33
    $region32: #{tpu_custom_call.1} parent=1 // pred_region
      _
    $region33: #{tpu_custom_call.1} parent=1 // pred_fallthru
      _
    // Predicated region
    $region34: #{tpu_custom_call.1} parent=1 // pred_check
      _
    $region35: #{tpu_custom_call.1} parent=1 // pred_check_branch
      %84 = sbr.rel (0) target = $region37
    $region36: #{tpu_custom_call.1} parent=1 // pred_region
      _
    $region37: #{tpu_custom_call.1} parent=1 // pred_fallthru
      _
    // Predicated region
    $region38: #{tpu_custom_call.1} parent=1 // pred_check
      _
    $region39: #{tpu_custom_call.1} parent=1 // pred_check_branch
      %86 = sbr.rel (0) target = $region41
    $region40: #{tpu_custom_call.1} parent=1 // pred_region
      _
    $region41: #{tpu_custom_call.1} parent=1 // pred_fallthru
      _
    // Predicated region
    $region42: #{tpu_custom_call.1} parent=1 // pred_check
      _
    $region43: #{tpu_custom_call.1} parent=1 // pred_check_branch
      %88 = sbr.rel (0) target = $region45
    $region44: #{tpu_custom_call.1} parent=1 // pred_region
      _
    $region45: #{tpu_custom_call.1} parent=1 // pred_fallthru
      _
    // Predicated region
    $region46: #{tpu_custom_call.1} parent=1 // pred_check
      _
    $region47: #{tpu_custom_call.1} parent=1 // pred_check_branch
      %90 = sbr.rel (0) target = $region49
    $region48: #{tpu_custom_call.1} parent=1 // pred_region
      _
    $region49: #{tpu_custom_call.1} parent=1 // pred_fallthru
      _
    // Predicated region
    $region50: #{tpu_custom_call.1} parent=1 // pred_check
      _
    $region51: #{tpu_custom_call.1} parent=1 // pred_check_branch
      %92 = sbr.rel (0) target = $region53
    $region52: #{tpu_custom_call.1} parent=1 // pred_region
      _
    $region53: #{tpu_custom_call.1} parent=1 // pred_fallthru
      _
    // Predicated region
    $region54: #{tpu_custom_call.1} parent=1 // pred_check
      _
    $region55: #{tpu_custom_call.1} parent=1 // pred_check_branch
      %94 = sbr.rel (0) target = $region57
    $region56: #{tpu_custom_call.1} parent=1 // pred_region
      _
    $region57: #{tpu_custom_call.1} parent=1 // pred_fallthru
      _
    // Predicated region
    $region58: #{tpu_custom_call.1} parent=1 // pred_check
      _
    $region59: #{tpu_custom_call.1} parent=1 // pred_check_branch
      %96 = sbr.rel (0) target = $region61
    $region60: #{tpu_custom_call.1} parent=1 // pred_region
      %98 = dma.done [#allocation3], 1024
    $region61: #{tpu_custom_call.1} parent=1 // pred_fallthru
      _
    // Predicated region
    $region62: #{tpu_custom_call.1} parent=1 // pred_check
      _
    $region63: #{tpu_custom_call.1} parent=1 // pred_check_branch
      %100 = sbr.rel (0) target = $region65
    $region64: #{tpu_custom_call.1} parent=1 // pred_region
      %102 = dma.done [#allocation6], 1024
    $region65: #{tpu_custom_call.1} parent=1 // pred_fallthru
      _
    // Predicated region
    $region66: #{tpu_custom_call.1} parent=1 // pred_check
      _
    $region67: #{tpu_custom_call.1} parent=1 // pred_check_branch
      %104 = sbr.rel (0) target = $region69
    $region68: #{tpu_custom_call.1} parent=1 // pred_region
      %106 = dma.done [#allocation6], 1024
    $region69: #{tpu_custom_call.1} parent=1 // pred_fallthru
      _
    // Predicated region
    $region70: #{tpu_custom_call.1} parent=1 // pred_check
      _
    $region71: #{tpu_custom_call.1} parent=1 // pred_check_branch
      %108 = sbr.rel (0) target = $region73
    $region72: #{tpu_custom_call.1} parent=1 // pred_region
      %110 = dma.done [#allocation9], 1024
    $region73: #{tpu_custom_call.1} parent=1 // pred_fallthru
      _
    %v112 = vld [vmem:[%s0] sm:$0xff]
    %v113 = vld [vmem:[%s0 + $0x8] sm:$0xff]
    %v114 = vpack.c.bf16 %v112, %v112
    %v115 = vpack.c.bf16 %v113, %v113
    %v116 = vld [vmem:[#allocation2] sm:$0xf]
    %v117 = vld [vmem:[#allocation2 + $0x4] sm:$0xf]
    %v118 = vld [vmem:[#allocation2 + $0x8] sm:$0xf]
    %v119 = vld [vmem:[#allocation2 + $0xc] sm:$0xf]
    %v120 = vld [vmem:[#allocation2 + $0x10] sm:$0xf]
    %v121 = vld [vmem:[#allocation2 + $0x14] sm:$0xf]
    %v122 = vld [vmem:[#allocation2 + $0x18] sm:$0xf]
    %v123 = vld [vmem:[#allocation2 + $0x1c] sm:$0xf]
    %v124 = vld [vmem:[#allocation2 + $0x20] sm:$0xf]
    %v125 = vld [vmem:[#allocation2 + $0x24] sm:$0xf]
    %v126 = vld [vmem:[#allocation2 + $0x28] sm:$0xf]
    %v127 = vld [vmem:[#allocation2 + $0x2c] sm:$0xf]
    %v128 = vld [vmem:[#allocation2 + $0x30] sm:$0xf]
    %v129 = vld [vmem:[#allocation2 + $0x34] sm:$0xf]
    %v130 = vld [vmem:[#allocation2 + $0x38] sm:$0xf]
    %v131 = vld [vmem:[#allocation2 + $0x3c] sm:$0xf]
    %v136 = vunpack.c.l.b16 %v116
    %v137 = vunpack.c.l.b16 %v117
    %v138 = vunpack.c.l.b16 %v118
    %v139 = vunpack.c.l.b16 %v119
    %v140 = vpack.c.b16 %v137, %v136
    %v141 = vpack.c.b16 %v139, %v138
    %vm144 = vcmask 261120
    %v146 = vsel %vm144, %v114, 0
    %148 = vmatpush.bf16.msra.mxu0 0
    %149 = vmatpush.bf16.msra.mxu0 0
    %150 = vmatpush.bf16.msra.mxu0 0
    %151 = vmatpush.bf16.msra.mxu0 0
    %152 = vmatpush.bf16.msra.mxu0 0
    %153 = vmatpush.bf16.msra.mxu0 0
    %154 = vmatpush.bf16.msra.mxu0 %v141
    %155 = vmatpush.bf16.msra.mxu0 %v140
    %156 = vmatmul.bf16.gmra.mxu0 %v146
    %v157 = vpop.f32.mrf.mxu0
    %v158 = vadd.f32 0.0, %v157
    %v159 = vpop.f32.mrf.mxu0
    %160 = vdwg.mxu0
    %v165 = vunpack.c.l.b16 %v120
    %v166 = vunpack.c.l.b16 %v121
    %v167 = vunpack.c.l.b16 %v122
    %v168 = vunpack.c.l.b16 %v123
    %v169 = vpack.c.b16 %v166, %v165
    %v170 = vpack.c.b16 %v168, %v167
    %v174 = vsel %vm144, %v115, 0
    %176 = vmatpush.bf16.msra.mxu0 0
    %177 = vmatpush.bf16.msra.mxu0 0
    %178 = vmatpush.bf16.msra.mxu0 0
    %179 = vmatpush.bf16.msra.mxu0 0
    %180 = vmatpush.bf16.msra.mxu0 0
    %181 = vmatpush.bf16.msra.mxu0 0
    %182 = vmatpush.bf16.msra.mxu0 %v170
    %183 = vmatpush.bf16.msra.mxu0 %v169
    %184 = vmatmul.bf16.gmra.mxu0 %v174
    %v185 = vpop.f32.mrf.mxu0
    %v186 = vadd.f32 0.0, %v185
    %v187 = vpop.f32.mrf.mxu0
    %188 = vdwg.mxu0
    %v193 = vunpack.c.l.b16 %v124
    %v194 = vunpack.c.l.b16 %v125
    %v195 = vunpack.c.l.b16 %v126
    %v196 = vunpack.c.l.b16 %v127
    %v197 = vpack.c.b16 %v194, %v193
    %v198 = vpack.c.b16 %v196, %v195
    %201 = vmatpush.bf16.msra.mxu0 0
    %202 = vmatpush.bf16.msra.mxu0 0
    %203 = vmatpush.bf16.msra.mxu0 0
    %204 = vmatpush.bf16.msra.mxu0 0
    %205 = vmatpush.bf16.msra.mxu0 0
    %206 = vmatpush.bf16.msra.mxu0 0
    %207 = vmatpush.bf16.msra.mxu0 %v198
    %208 = vmatpush.bf16.msra.mxu0 %v197
    %209 = vmatmul.bf16.gmra.mxu0 %v146
    %v210 = vpop.f32.mrf.mxu0
    %v211 = vadd.f32 0.0, %v210
    %v212 = vpop.f32.mrf.mxu0
    %213 = vdwg.mxu0
    %v218 = vunpack.c.l.b16 %v128
    %v219 = vunpack.c.l.b16 %v129
    %v220 = vunpack.c.l.b16 %v130
    %v221 = vunpack.c.l.b16 %v131
    %v222 = vpack.c.b16 %v219, %v218
    %v223 = vpack.c.b16 %v221, %v220
    %226 = vmatpush.bf16.msra.mxu0 0
    %227 = vmatpush.bf16.msra.mxu0 0
    %228 = vmatpush.bf16.msra.mxu0 0
    %229 = vmatpush.bf16.msra.mxu0 0
    %230 = vmatpush.bf16.msra.mxu0 0
    %231 = vmatpush.bf16.msra.mxu0 0
    %232 = vmatpush.bf16.msra.mxu0 %v223
    %233 = vmatpush.bf16.msra.mxu0 %v222
    %234 = vmatmul.bf16.gmra.mxu0 %v174
    %v235 = vpop.f32.mrf.mxu0
    %v236 = vadd.f32 0.0, %v235
    %v237 = vpop.f32.mrf.mxu0
    %238 = vdwg.mxu0
    %v239 = vld [vmem:[#allocation5] sm:$0xf]
    %v240 = vld [vmem:[#allocation5 + $0x4] sm:$0xf]
    %v241 = vld [vmem:[#allocation5 + $0x8] sm:$0xf]
    %v242 = vld [vmem:[#allocation5 + $0xc] sm:$0xf]
    %v243 = vld [vmem:[#allocation5 + $0x10] sm:$0xf]
    %v244 = vld [vmem:[#allocation5 + $0x14] sm:$0xf]
    %v245 = vld [vmem:[#allocation5 + $0x18] sm:$0xf]
    %v246 = vld [vmem:[#allocation5 + $0x1c] sm:$0xf]
    %v247 = vld [vmem:[#allocation5 + $0x20] sm:$0xf]
    %v248 = vld [vmem:[#allocation5 + $0x24] sm:$0xf]
    %v249 = vld [vmem:[#allocation5 + $0x28] sm:$0xf]
    %v250 = vld [vmem:[#allocation5 + $0x2c] sm:$0xf]
    %v251 = vld [vmem:[#allocation5 + $0x30] sm:$0xf]
    %v252 = vld [vmem:[#allocation5 + $0x34] sm:$0xf]
    %v253 = vld [vmem:[#allocation5 + $0x38] sm:$0xf]
    %v254 = vld [vmem:[#allocation5 + $0x3c] sm:$0xf]
    %v259 = vunpack.c.l.b16 %v239
    %v260 = vunpack.c.l.b16 %v240
    %v261 = vunpack.c.l.b16 %v241
    %v262 = vunpack.c.l.b16 %v242
    %v263 = vpack.c.b16 %v260, %v259
    %v264 = vpack.c.b16 %v262, %v261
    %267 = vmatpush.bf16.msra.mxu0 0
    %268 = vmatpush.bf16.msra.mxu0 0
    %269 = vmatpush.bf16.msra.mxu0 0
    %270 = vmatpush.bf16.msra.mxu0 0
    %271 = vmatpush.bf16.msra.mxu0 0
    %272 = vmatpush.bf16.msra.mxu0 0
    %273 = vmatpush.bf16.msra.mxu0 %v264
    %274 = vmatpush.bf16.msra.mxu0 %v263
    %275 = vmatmul.bf16.gmra.mxu0 %v146
    %v276 = vpop.f32.mrf.mxu0
    %v277 = vadd.f32 0.0, %v276
    %v278 = vpop.f32.mrf.mxu0
    %279 = vdwg.mxu0
    %v284 = vunpack.c.l.b16 %v243
    %v285 = vunpack.c.l.b16 %v244
    %v286 = vunpack.c.l.b16 %v245
    %v287 = vunpack.c.l.b16 %v246
    %v288 = vpack.c.b16 %v285, %v284
    %v289 = vpack.c.b16 %v287, %v286
    %292 = vmatpush.bf16.msra.mxu0 0
    %293 = vmatpush.bf16.msra.mxu0 0
    %294 = vmatpush.bf16.msra.mxu0 0
    %295 = vmatpush.bf16.msra.mxu0 0
    %296 = vmatpush.bf16.msra.mxu0 0
    %297 = vmatpush.bf16.msra.mxu0 0
    %298 = vmatpush.bf16.msra.mxu0 %v289
    %299 = vmatpush.bf16.msra.mxu0 %v288
    %300 = vmatmul.bf16.gmra.mxu0 %v174
    %v301 = vpop.f32.mrf.mxu0
    %v302 = vadd.f32 0.0, %v301
    %v303 = vpop.f32.mrf.mxu0
    %304 = vdwg.mxu0
    %v309 = vunpack.c.l.b16 %v247
    %v310 = vunpack.c.l.b16 %v248
    %v311 = vunpack.c.l.b16 %v249
    %v312 = vunpack.c.l.b16 %v250
    %v313 = vpack.c.b16 %v310, %v309
    %v314 = vpack.c.b16 %v312, %v311
    %317 = vmatpush.bf16.msra.mxu0 0
    %318 = vmatpush.bf16.msra.mxu0 0
    %319 = vmatpush.bf16.msra.mxu0 0
    %320 = vmatpush.bf16.msra.mxu0 0
    %321 = vmatpush.bf16.msra.mxu0 0
    %322 = vmatpush.bf16.msra.mxu0 0
    %323 = vmatpush.bf16.msra.mxu0 %v314
    %324 = vmatpush.bf16.msra.mxu0 %v313
    %325 = vmatmul.bf16.gmra.mxu0 %v146
    %v326 = vpop.f32.mrf.mxu0
    %v327 = vadd.f32 0.0, %v326
    %v328 = vpop.f32.mrf.mxu0
    %329 = vdwg.mxu0
    %v334 = vunpack.c.l.b16 %v251
    %v335 = vunpack.c.l.b16 %v252
    %v336 = vunpack.c.l.b16 %v253
    %v337 = vunpack.c.l.b16 %v254
    %v338 = vpack.c.b16 %v335, %v334
    %v339 = vpack.c.b16 %v337, %v336
    %342 = vmatpush.bf16.msra.mxu0 0
    %343 = vmatpush.bf16.msra.mxu0 0
    %344 = vmatpush.bf16.msra.mxu0 0
    %345 = vmatpush.bf16.msra.mxu0 0
    %346 = vmatpush.bf16.msra.mxu0 0
    %347 = vmatpush.bf16.msra.mxu0 0
    %348 = vmatpush.bf16.msra.mxu0 %v339
    %349 = vmatpush.bf16.msra.mxu0 %v338
    %350 = vmatmul.bf16.gmra.mxu0 %v174
    %v351 = vpop.f32.mrf.mxu0
    %v352 = vadd.f32 0.0, %v351
    %v353 = vpop.f32.mrf.mxu0
    %354 = vdwg.mxu0
    %v355 = vld [vmem:[#allocation7] sm:$0xf]
    %v356 = vld [vmem:[#allocation7 + $0x4] sm:$0xf]
    %v357 = vld [vmem:[#allocation7 + $0x8] sm:$0xf]
    %v358 = vld [vmem:[#allocation7 + $0xc] sm:$0xf]
    %v359 = vld [vmem:[#allocation7 + $0x10] sm:$0xf]
    %v360 = vld [vmem:[#allocation7 + $0x14] sm:$0xf]
    %v361 = vld [vmem:[#allocation7 + $0x18] sm:$0xf]
    %v362 = vld [vmem:[#allocation7 + $0x1c] sm:$0xf]
    %v363 = vld [vmem:[#allocation7 + $0x20] sm:$0xf]
    %v364 = vld [vmem:[#allocation7 + $0x24] sm:$0xf]
    %v365 = vld [vmem:[#allocation7 + $0x28] sm:$0xf]
    %v366 = vld [vmem:[#allocation7 + $0x2c] sm:$0xf]
    %v367 = vld [vmem:[#allocation7 + $0x30] sm:$0xf]
    %v368 = vld [vmem:[#allocation7 + $0x34] sm:$0xf]
    %v369 = vld [vmem:[#allocation7 + $0x38] sm:$0xf]
    %v370 = vld [vmem:[#allocation7 + $0x3c] sm:$0xf]
    %v375 = vunpack.c.l.b16 %v355
    %v376 = vunpack.c.l.b16 %v356
    %v377 = vunpack.c.l.b16 %v357
    %v378 = vunpack.c.l.b16 %v358
    %v379 = vpack.c.b16 %v376, %v375
    %v380 = vpack.c.b16 %v378, %v377
    %383 = vmatpush.bf16.msra.mxu0 0
    %384 = vmatpush.bf16.msra.mxu0 0
    %385 = vmatpush.bf16.msra.mxu0 0
    %386 = vmatpush.bf16.msra.mxu0 0
    %387 = vmatpush.bf16.msra.mxu0 0
    %388 = vmatpush.bf16.msra.mxu0 0
    %389 = vmatpush.bf16.msra.mxu0 %v380
    %390 = vmatpush.bf16.msra.mxu0 %v379
    %391 = vmatmul.bf16.gmra.mxu0 %v146
    %v392 = vpop.f32.mrf.mxu0
    %v393 = vadd.f32 0.0, %v392
    %v394 = vpop.f32.mrf.mxu0
    %395 = vdwg.mxu0
    %v400 = vunpack.c.l.b16 %v359
    %v401 = vunpack.c.l.b16 %v360
    %v402 = vunpack.c.l.b16 %v361
    %v403 = vunpack.c.l.b16 %v362
    %v404 = vpack.c.b16 %v401, %v400
    %v405 = vpack.c.b16 %v403, %v402
    %408 = vmatpush.bf16.msra.mxu0 0
    %409 = vmatpush.bf16.msra.mxu0 0
    %410 = vmatpush.bf16.msra.mxu0 0
    %411 = vmatpush.bf16.msra.mxu0 0
    %412 = vmatpush.bf16.msra.mxu0 0
    %413 = vmatpush.bf16.msra.mxu0 0
    %414 = vmatpush.bf16.msra.mxu0 %v405
    %415 = vmatpush.bf16.msra.mxu0 %v404
    %416 = vmatmul.bf16.gmra.mxu0 %v174
    %v417 = vpop.f32.mrf.mxu0
    %v418 = vadd.f32 0.0, %v417
    %v419 = vpop.f32.mrf.mxu0
    %420 = vdwg.mxu0
    %v425 = vunpack.c.l.b16 %v363
    %v426 = vunpack.c.l.b16 %v364
    %v427 = vunpack.c.l.b16 %v365
    %v428 = vunpack.c.l.b16 %v366
    %v429 = vpack.c.b16 %v426, %v425
    %v430 = vpack.c.b16 %v428, %v427
    %433 = vmatpush.bf16.msra.mxu0 0
    %434 = vmatpush.bf16.msra.mxu0 0
    %435 = vmatpush.bf16.msra.mxu0 0
    %436 = vmatpush.bf16.msra.mxu0 0
    %437 = vmatpush.bf16.msra.mxu0 0
    %438 = vmatpush.bf16.msra.mxu0 0
    %439 = vmatpush.bf16.msra.mxu0 %v430
    %440 = vmatpush.bf16.msra.mxu0 %v429
    %441 = vmatmul.bf16.gmra.mxu0 %v146
    %v442 = vpop.f32.mrf.mxu0
    %v443 = vadd.f32 0.0, %v442
    %v444 = vpop.f32.mrf.mxu0
    %445 = vdwg.mxu0
    %v450 = vunpack.c.l.b16 %v367
    %v451 = vunpack.c.l.b16 %v368
    %v452 = vunpack.c.l.b16 %v369
    %v453 = vunpack.c.l.b16 %v370
    %v454 = vpack.c.b16 %v451, %v450
    %v455 = vpack.c.b16 %v453, %v452
    %458 = vmatpush.bf16.msra.mxu0 0
    %459 = vmatpush.bf16.msra.mxu0 0
    %460 = vmatpush.bf16.msra.mxu0 0
    %461 = vmatpush.bf16.msra.mxu0 0
    %462 = vmatpush.bf16.msra.mxu0 0
    %463 = vmatpush.bf16.msra.mxu0 0
    %464 = vmatpush.bf16.msra.mxu0 %v455
    %465 = vmatpush.bf16.msra.mxu0 %v454
    %466 = vmatmul.bf16.gmra.mxu0 %v174
    %v467 = vpop.f32.mrf.mxu0
    %v468 = vadd.f32 0.0, %v467
    %v469 = vpop.f32.mrf.mxu0
    %470 = vdwg.mxu0
    %v471 = vpack.c.bf16 %v158, %v158
    %v472 = vpack.c.bf16 %v186, %v186
    %v473 = vpack.c.bf16 %v211, %v211
    %v474 = vpack.c.bf16 %v236, %v236
    %v475 = vpack.c.bf16 %v277, %v277
    %v476 = vpack.c.bf16 %v302, %v302
    %v477 = vpack.c.bf16 %v327, %v327
    %v478 = vpack.c.bf16 %v352, %v352
    %v480 = vsel %vm144, %v471, 0
    %v483 = vsel %vm144, %v475, 0
    %485 = vmatpush.bf16.xpose.msra.mxu0 0
    %486 = vmatpush.bf16.xpose.msra.mxu0 0
    %487 = vmatpush.bf16.xpose.msra.mxu0 0
    %488 = vmatpush.bf16.xpose.msra.mxu0 0
    %489 = vmatpush.bf16.xpose.msra.mxu0 0
    %490 = vmatpush.bf16.xpose.msra.mxu0 0
    %491 = vmatpush.bf16.xpose.msra.mxu0 0
    %492 = vmatpush.bf16.xpose.msra.mxu0 %v483
    %493 = vmatmul.bf16.gmra.mxu0 %v480
    %v494 = vpop.f32.mrf.mxu0
    %v495 = vadd.f32 0.0, %v494
    %v496 = vpop.f32.mrf.mxu0
    %497 = vdwg.mxu0
    %v499 = vsel %vm144, %v472, 0
    %v502 = vsel %vm144, %v476, 0
    %504 = vmatpush.bf16.xpose.msra.mxu0 0
    %505 = vmatpush.bf16.xpose.msra.mxu0 0
    %506 = vmatpush.bf16.xpose.msra.mxu0 0
    %507 = vmatpush.bf16.xpose.msra.mxu0 0
    %508 = vmatpush.bf16.xpose.msra.mxu0 0
    %509 = vmatpush.bf16.xpose.msra.mxu0 0
    %510 = vmatpush.bf16.xpose.msra.mxu0 0
    %511 = vmatpush.bf16.xpose.msra.mxu0 %v502
    %512 = vmatmul.bf16.gmra.mxu0 %v499
    %v513 = vpop.f32.mrf.mxu0
    %v514 = vadd.f32 0.0, %v513
    %v515 = vpop.f32.mrf.mxu0
    %516 = vdwg.mxu0
    %v518 = vsel %vm144, %v473, 0
    %v521 = vsel %vm144, %v477, 0
    %523 = vmatpush.bf16.xpose.msra.mxu0 0
    %524 = vmatpush.bf16.xpose.msra.mxu0 0
    %525 = vmatpush.bf16.xpose.msra.mxu0 0
    %526 = vmatpush.bf16.xpose.msra.mxu0 0
    %527 = vmatpush.bf16.xpose.msra.mxu0 0
    %528 = vmatpush.bf16.xpose.msra.mxu0 0
    %529 = vmatpush.bf16.xpose.msra.mxu0 0
    %530 = vmatpush.bf16.xpose.msra.mxu0 %v521
    %531 = vmatmul.bf16.gmra.mxu0 %v518
    %v532 = vpop.f32.mrf.mxu0
    %v533 = vadd.f32 0.0, %v532
    %v534 = vpop.f32.mrf.mxu0
    %535 = vdwg.mxu0
    %v537 = vsel %vm144, %v474, 0
    %v540 = vsel %vm144, %v478, 0
    %542 = vmatpush.bf16.xpose.msra.mxu0 0
    %543 = vmatpush.bf16.xpose.msra.mxu0 0
    %544 = vmatpush.bf16.xpose.msra.mxu0 0
    %545 = vmatpush.bf16.xpose.msra.mxu0 0
    %546 = vmatpush.bf16.xpose.msra.mxu0 0
    %547 = vmatpush.bf16.xpose.msra.mxu0 0
    %548 = vmatpush.bf16.xpose.msra.mxu0 0
    %549 = vmatpush.bf16.xpose.msra.mxu0 %v540
    %550 = vmatmul.bf16.gmra.mxu0 %v537
    %v551 = vpop.f32.mrf.mxu0
    %v552 = vadd.f32 0.0, %v551
    %v553 = vpop.f32.mrf.mxu0
    %554 = vdwg.mxu0
    %v555 = vmul.f32 %v495, 0.17677669
    %v556 = vmul.f32 %v514, 0.17677669
    %v557 = vmul.f32 %v533, 0.17677669
    %v558 = vmul.f32 %v552, 0.17677669
    %vm559 = vcmask 64512
    %v560 = vsel %vm559, %v555, -inf
    %561 = vmax.xlane.f32.xlu0 %v560
    %v562 = vpop.xlane.xlu0 %561
    %v563 = vsel %vm559, %v556, -inf
    %564 = vmax.xlane.f32.xlu0 %v563
    %v565 = vpop.xlane.xlu0 %564
    %v566 = vsel %vm559, %v557, -inf
    %567 = vmax.xlane.f32.xlu0 %v566
    %v568 = vpop.xlane.xlu0 %567
    %v569 = vsel %vm559, %v558, -inf
    %570 = vmax.xlane.f32.xlu0 %v569
    %v571 = vpop.xlane.xlu0 %570
    %v572 = vsub.f32 %v555, %v562
    %v573 = vsub.f32 %v556, %v565
    %v574 = vsub.f32 %v557, %v568
    %v575 = vsub.f32 %v558, %v571
    %v576 = vmul.f32 %v572, 1.442695
    %v577 = vpow.pop %v576
    %v578 = vmul.f32 %v573, 1.442695
    %v579 = vpow.pop %v578
    %v580 = vmul.f32 %v574, 1.442695
    %v581 = vpow.pop %v580
    %v582 = vmul.f32 %v575, 1.442695
    %v583 = vpow.pop %v582
    %v584 = vsel %vm559, %v577, 0.0
    %585 = vadd.xlane.f32.xlu0 %v584
    %v586 = vpop.xlane.xlu0 %585
    %v587 = vsel %vm559, %v579, 0.0
    %588 = vadd.xlane.f32.xlu0 %v587
    %v589 = vpop.xlane.xlu0 %588
    %v590 = vsel %vm559, %v581, 0.0
    %591 = vadd.xlane.f32.xlu0 %v590
    %v592 = vpop.xlane.xlu0 %591
    %v593 = vsel %vm559, %v583, 0.0
    %594 = vadd.xlane.f32.xlu0 %v593
    %v595 = vpop.xlane.xlu0 %594
    %v596 = vrcp.pop %v586
    %v597 = vrcp.pop %v589
    %v598 = vrcp.pop %v592
    %v599 = vrcp.pop %v595
    %v600 = vmul.f32 %v577, %v596
    %v601 = vmul.f32 %v579, %v597
    %v602 = vmul.f32 %v581, %v598
    %v603 = vmul.f32 %v583, %v599
    %v604 = vpack.c.bf16 %v600, %v600
    %v605 = vpack.c.bf16 %v601, %v601
    %v606 = vpack.c.bf16 %v602, %v602
    %v607 = vpack.c.bf16 %v603, %v603
    %v608 = vpack.c.bf16 %v393, %v393
    %v609 = vpack.c.bf16 %v418, %v418
    %v610 = vpack.c.bf16 %v443, %v443
    %v611 = vpack.c.bf16 %v468, %v468
    %v613 = vsel %vm559, %v604, 0
    %vm615 = vcmask 1043456
    %v617 = vsel %vm615, %v608, 0
    %619 = vmatpush.bf16.msra.mxu0 0
    %620 = vmatpush.bf16.msra.mxu0 0
    %621 = vmatpush.bf16.msra.mxu0 0
    %622 = vmatpush.bf16.msra.mxu0 0
    %623 = vmatpush.bf16.msra.mxu0 0
    %624 = vmatpush.bf16.msra.mxu0 0
    %625 = vmatpush.bf16.msra.mxu0 0
    %626 = vmatpush.bf16.msra.mxu0 %v617
    %627 = vmatmul.bf16.gmra.mxu0 %v613
    %v628 = vpop.f32.mrf.mxu0
    %v629 = vadd.f32 0.0, %v628
    %v630 = vpop.f32.mrf.mxu0
    %631 = vdwg.mxu0
    %v633 = vsel %vm559, %v605, 0
    %v636 = vsel %vm615, %v609, 0
    %638 = vmatpush.bf16.msra.mxu0 0
    %639 = vmatpush.bf16.msra.mxu0 0
    %640 = vmatpush.bf16.msra.mxu0 0
    %641 = vmatpush.bf16.msra.mxu0 0
    %642 = vmatpush.bf16.msra.mxu0 0
    %643 = vmatpush.bf16.msra.mxu0 0
    %644 = vmatpush.bf16.msra.mxu0 0
    %645 = vmatpush.bf16.msra.mxu0 %v636
    %646 = vmatmul.bf16.gmra.mxu0 %v633
    %v647 = vpop.f32.mrf.mxu0
    %v648 = vadd.f32 0.0, %v647
    %v649 = vpop.f32.mrf.mxu0
    %650 = vdwg.mxu0
    %v652 = vsel %vm559, %v606, 0
    %v655 = vsel %vm615, %v610, 0
    %657 = vmatpush.bf16.msra.mxu0 0
    %658 = vmatpush.bf16.msra.mxu0 0
    %659 = vmatpush.bf16.msra.mxu0 0
    %660 = vmatpush.bf16.msra.mxu0 0
    %661 = vmatpush.bf16.msra.mxu0 0
    %662 = vmatpush.bf16.msra.mxu0 0
    %663 = vmatpush.bf16.msra.mxu0 0
    %664 = vmatpush.bf16.msra.mxu0 %v655
    %665 = vmatmul.bf16.gmra.mxu0 %v652
    %v666 = vpop.f32.mrf.mxu0
    %v667 = vadd.f32 0.0, %v666
    %v668 = vpop.f32.mrf.mxu0
    %669 = vdwg.mxu0
    %v671 = vsel %vm559, %v607, 0
    %v674 = vsel %vm615, %v611, 0
    %676 = vmatpush.bf16.msra.mxu0 0
    %677 = vmatpush.bf16.msra.mxu0 0
    %678 = vmatpush.bf16.msra.mxu0 0
    %679 = vmatpush.bf16.msra.mxu0 0
    %680 = vmatpush.bf16.msra.mxu0 0
    %681 = vmatpush.bf16.msra.mxu0 0
    %682 = vmatpush.bf16.msra.mxu0 0
    %683 = vmatpush.bf16.msra.mxu0 %v674
    %684 = vmatmul.bf16.gmra.mxu0 %v671
    %v685 = vpop.f32.mrf.mxu0
    %v686 = vadd.f32 0.0, %v685
    %v687 = vpop.f32.mrf.mxu0
    %688 = vdwg.mxu0
    %v689 = vpack.c.bf16 %v629, %v629
    %v690 = vpack.c.bf16 %v648, %v648
    %v691 = vpack.c.bf16 %v667, %v667
    %v692 = vpack.c.bf16 %v686, %v686
    %v693 = vld [vmem:[#allocation8] sm:$0xf]
    %v694 = vld [vmem:[#allocation8 + $0x4] sm:$0xf]
    %v695 = vld [vmem:[#allocation8 + $0x8] sm:$0xf]
    %v696 = vld [vmem:[#allocation8 + $0xc] sm:$0xf]
    %v697 = vld [vmem:[#allocation8 + $0x10] sm:$0xf]
    %v698 = vld [vmem:[#allocation8 + $0x14] sm:$0xf]
    %v699 = vld [vmem:[#allocation8 + $0x18] sm:$0xf]
    %v700 = vld [vmem:[#allocation8 + $0x1c] sm:$0xf]
    %v701 = vld [vmem:[#allocation8 + $0x20] sm:$0xf]
    %v702 = vld [vmem:[#allocation8 + $0x24] sm:$0xf]
    %v703 = vld [vmem:[#allocation8 + $0x28] sm:$0xf]
    %v704 = vld [vmem:[#allocation8 + $0x2c] sm:$0xf]
    %v705 = vld [vmem:[#allocation8 + $0x30] sm:$0xf]
    %v706 = vld [vmem:[#allocation8 + $0x34] sm:$0xf]
    %v707 = vld [vmem:[#allocation8 + $0x38] sm:$0xf]
    %v708 = vld [vmem:[#allocation8 + $0x3c] sm:$0xf]
    %v713 = vunpack.c.l.b16 %v693
    %v714 = vunpack.c.l.b16 %v694
    %v715 = vunpack.c.l.b16 %v695
    %v716 = vunpack.c.l.b16 %v696
    %v717 = vpack.c.b16 %v714, %v713
    %v718 = vpack.c.b16 %v716, %v715
    %v722 = vsel %vm144, %v689, 0
    %724 = vmatpush.bf16.msra.mxu0 0
    %725 = vmatpush.bf16.msra.mxu0 0
    %726 = vmatpush.bf16.msra.mxu0 0
    %727 = vmatpush.bf16.msra.mxu0 0
    %728 = vmatpush.bf16.msra.mxu0 0
    %729 = vmatpush.bf16.msra.mxu0 0
    %730 = vmatpush.bf16.msra.mxu0 %v718
    %731 = vmatpush.bf16.msra.mxu0 %v717
    %732 = vmatmul.bf16.gmra.mxu0 %v722
    %v733 = vpop.f32.mrf.mxu0
    %v734 = vadd.f32 0.0, %v733
    %v735 = vpop.f32.mrf.mxu0
    %736 = vdwg.mxu0
    %v741 = vunpack.c.l.b16 %v697
    %v742 = vunpack.c.l.b16 %v698
    %v743 = vunpack.c.l.b16 %v699
    %v744 = vunpack.c.l.b16 %v700
    %v745 = vpack.c.b16 %v742, %v741
    %v746 = vpack.c.b16 %v744, %v743
    %v750 = vsel %vm144, %v690, 0
    %752 = vmatpush.bf16.msra.mxu0 0
    %753 = vmatpush.bf16.msra.mxu0 0
    %754 = vmatpush.bf16.msra.mxu0 0
    %755 = vmatpush.bf16.msra.mxu0 0
    %756 = vmatpush.bf16.msra.mxu0 0
    %757 = vmatpush.bf16.msra.mxu0 0
    %758 = vmatpush.bf16.msra.mxu0 %v746
    %759 = vmatpush.bf16.msra.mxu0 %v745
    %760 = vmatmul.bf16.gmra.mxu0 %v750
    %v761 = vpop.f32.mrf.mxu0
    %v762 = vadd.f32 0.0, %v761
    %v763 = vpop.f32.mrf.mxu0
    %764 = vdwg.mxu0
    %v769 = vunpack.c.l.b16 %v701
    %v770 = vunpack.c.l.b16 %v702
    %v771 = vunpack.c.l.b16 %v703
    %v772 = vunpack.c.l.b16 %v704
    %v773 = vpack.c.b16 %v770, %v769
    %v774 = vpack.c.b16 %v772, %v771
    %v778 = vsel %vm144, %v691, 0
    %780 = vmatpush.bf16.msra.mxu0 0
    %781 = vmatpush.bf16.msra.mxu0 0
    %782 = vmatpush.bf16.msra.mxu0 0
    %783 = vmatpush.bf16.msra.mxu0 0
    %784 = vmatpush.bf16.msra.mxu0 0
    %785 = vmatpush.bf16.msra.mxu0 0
    %786 = vmatpush.bf16.msra.mxu0 %v774
    %787 = vmatpush.bf16.msra.mxu0 %v773
    %788 = vmatmul.bf16.gmra.mxu0 %v778
    %v789 = vpop.f32.mrf.mxu0
    %v790 = vadd.f32 0.0, %v789
    %v791 = vpop.f32.mrf.mxu0
    %792 = vdwg.mxu0
    %v797 = vunpack.c.l.b16 %v705
    %v798 = vunpack.c.l.b16 %v706
    %v799 = vunpack.c.l.b16 %v707
    %v800 = vunpack.c.l.b16 %v708
    %v801 = vpack.c.b16 %v798, %v797
    %v802 = vpack.c.b16 %v800, %v799
    %v806 = vsel %vm144, %v692, 0
    %808 = vmatpush.bf16.msra.mxu0 0
    %809 = vmatpush.bf16.msra.mxu0 0
    %810 = vmatpush.bf16.msra.mxu0 0
    %811 = vmatpush.bf16.msra.mxu0 0
    %812 = vmatpush.bf16.msra.mxu0 0
    %813 = vmatpush.bf16.msra.mxu0 0
    %814 = vmatpush.bf16.msra.mxu0 %v802
    %815 = vmatpush.bf16.msra.mxu0 %v801
    %816 = vmatmul.bf16.gmra.mxu0 %v806
    %v817 = vpop.f32.mrf.mxu0
    %v818 = vadd.f32 0.0, %v817
    %v819 = vpop.f32.mrf.mxu0
    %820 = vdwg.mxu0
    %v821 = vadd.f32 %v734, %v790
    %v822 = vadd.f32 %v762, %v818
    %v823 = vld [vmem:[%s5] sm:$0x1]
    %v825 = vperm.slane %v823, 0
    %v827 = vadd.f32 %v821, %v825
    %v828 = vadd.f32 %v822, %v825
    %v829 = vadd.f32 %v827, %v112
    %v830 = vadd.f32 %v828, %v113
    %v831 = vsel %vm144, %v829, 0.0
    %832 = vadd.xlane.f32.xlu0 %v831
    %v833 = vpop.xlane.xlu0 %832
    %v834 = vsel %vm144, %v830, 0.0
    %835 = vadd.xlane.f32.xlu0 %v834
    %v836 = vpop.xlane.xlu0 %835
    %v837 = vrcp.pop 32.0
    %v838 = vmul.f32 32.0, %v837
    %v839 = vsub.f32 1.0, %v838
    %v840 = vmul.f32 %v837, %v839
    %v841 = vadd.f32 %v837, %v840
    %vm842 = vweird.f32 %v837
    %v843 = vsel %vm842, %v837, %v841
    %v844 = vmul.f32 %v833, %v843
    %v845 = vmul.f32 %v836, %v843
    %v846 = vsub.f32 %v829, %v844
    %v847 = vsub.f32 %v830, %v845
    %v848 = vmul.f32 %v846, %v846
    %v849 = vmul.f32 %v847, %v847
    %v850 = vsel %vm144, %v848, 0.0
    %851 = vadd.xlane.f32.xlu0 %v850
    %v852 = vpop.xlane.xlu0 %851
    %v853 = vsel %vm144, %v849, 0.0
    %854 = vadd.xlane.f32.xlu0 %v853
    %v855 = vpop.xlane.xlu0 %854
    %v856 = vmul.f32 %v852, %v843
    %v857 = vmul.f32 %v855, %v843
    %v858 = vadd.f32 %v856, 1e-05
    %v859 = vadd.f32 %v857, 1e-05
    %v860 = vrsqrt.pop %v858
    %v861 = vmul.f32 %v860, %v858
    %v862 = vmul.f32 %v861, %v860
    %v863 = vmul.f32 0.5, %v862
    %v864 = vsub.f32 1.5, %v863
    %v865 = vmul.f32 %v860, %v864
    %vm866 = vweird.f32 %v858
    %vm867 = vweird.f32 %v860
    %vm868 = vmor %vm866, %vm867
    %v869 = vsel %vm868, %v860, %v865
    %v870 = vrsqrt.pop %v859
    %v871 = vmul.f32 %v870, %v859
    %v872 = vmul.f32 %v871, %v870
    %v873 = vmul.f32 0.5, %v872
    %v874 = vsub.f32 1.5, %v873
    %v875 = vmul.f32 %v870, %v874
    %vm876 = vweird.f32 %v859
    %vm877 = vweird.f32 %v870
    %vm878 = vmor %vm876, %vm877
    %v879 = vsel %vm878, %v870, %v875
    %v880 = vmul.f32 %v846, %v869
    %v881 = vmul.f32 %v847, %v879
    %v882 = vld [vmem:[%s10] sm:$0x1]
    %v884 = vperm.slane %v882, 0
    %v886 = vmul.f32 %v880, %v884
    %v887 = vmul.f32 %v881, %v884
    %v888 = vld [vmem:[%s11] sm:$0x1]
    %v890 = vperm.slane %v888, 0
    %v892 = vadd.f32 %v886, %v890
    %v893 = vadd.f32 %v887, %v890
    %v894 = vpack.c.bf16 %v893, %v892
    %v895 = vld [vmem:[%s6] sm:$0xf]
    %v896 = vld [vmem:[%s6 + $0x4] sm:$0xf]
    %v897 = vld [vmem:[%s6 + $0x8] sm:$0xf]
    %v898 = vld [vmem:[%s6 + $0xc] sm:$0xf]
    %v899 = vld [vmem:[%s7] sm:$0x1]
    %v901 = vperm.slane %v899, 0
    %v907 = vunpack.c.l.b16 %v895
    %v908 = vunpack.c.l.b16 %v896
    %v909 = vunpack.c.l.b16 %v897
    %v910 = vunpack.c.l.b16 %v898
    %v911 = vpack.c.b16 %v908, %v907
    %v912 = vpack.c.b16 %v910, %v909
    %v916 = vsel %vm144, %v894, 0
    %918 = vmatpush.bf16.msra.mxu0 0
    %919 = vmatpush.bf16.msra.mxu0 0
    %920 = vmatpush.bf16.msra.mxu0 0
    %921 = vmatpush.bf16.msra.mxu0 0
    %922 = vmatpush.bf16.msra.mxu0 0
    %923 = vmatpush.bf16.msra.mxu0 0
    %924 = vmatpush.bf16.msra.mxu0 %v912
    %925 = vmatpush.bf16.msra.mxu0 %v911
    %926 = vmatmul.bf16.gmra.mxu0 %v916
    %v927 = vpop.f32.mrf.mxu0
    %v928 = vadd.f32 %v901, %v927
    %v929 = vpop.f32.mrf.mxu0
    %v930 = vadd.f32 %v901, %v929
    %931 = vdwg.mxu0
    %v932 = vmul.f32 %v928, 0.5
    %v933 = vmul.f32 %v930, 0.5
    %v934 = vrcp.pop 1.4142135
    %v935 = vmul.f32 1.4142135, %v934
    %v936 = vsub.f32 1.0, %v935
    %v937 = vmul.f32 %v934, %v936
    %v938 = vadd.f32 %v934, %v937
    %vm939 = vweird.f32 %v934
    %v940 = vsel %vm939, %v934, %v938
    %v941 = vmul.f32 %v928, %v940
    %v942 = vmul.f32 %v930, %v940
    %v943 = vmul.f32 %v941, %v941
    %v944 = vmin.f32 16.0, %v943
    %v945 = vmul.f32 %v944, 2.1237322e-06
    %v946 = vadd.f32 %v945, 0.00028619796
    %v947 = vmul.f32 %v944, %v946
    %v948 = vadd.f32 %v947, 0.0036580483
    %v949 = vmul.f32 %v944, %v948
    %v950 = vadd.f32 %v949, 0.05243302
    %v951 = vmul.f32 %v944, %v950
    %v952 = vadd.f32 %v951, 0.18741608
    %v953 = vmul.f32 %v944, %v952
    %v954 = vadd.f32 %v953, 1.1283791
    %v955 = vmul.f32 %v941, %v954
    %v956 = vmul.f32 %v944, 3.8918573e-05
    %v957 = vadd.f32 %v956, 0.001143296
    %v958 = vmul.f32 %v944, %v957
    %v959 = vadd.f32 %v958, 0.014752088
    %v960 = vmul.f32 %v944, %v959
    %v961 = vadd.f32 %v960, 0.112945676
    %v962 = vmul.f32 %v944, %v961
    %v963 = vadd.f32 %v962, 0.4994258
    %v964 = vmul.f32 %v944, %v963
    %v965 = vadd.f32 %v964, 1.0
    %v966 = vrcp.pop %v965
    %v967 = vmul.f32 %v965, %v966
    %v968 = vsub.f32 1.0, %v967
    %v969 = vmul.f32 %v966, %v968
    %v970 = vadd.f32 %v966, %v969
    %vm971 = vweird.f32 %v965
    %vm972 = vweird.f32 %v966
    %vm973 = vmor %vm971, %vm972
    %v974 = vsel %vm973, %v966, %v970
    %v975 = vand.u32 2147483647, %v965
    %vm976 = vcmp.eq.f32.partialorder %v975, 8.507059e+37
    %v977 = vand.u32 %v965, 2147483648
    %v978 = vor.u32 1.1754944e-38, %v977
    %v979 = vsel %vm976, %v978, %v974
    %v980 = vmul.f32 %v955, %v979
    %v981 = vmin.f32 %v980, 1.0
    %v982 = vmax.f32 %v981, -1.0
    %v983 = vmul.f32 %v942, %v942
    %v984 = vmin.f32 16.0, %v983
    %v985 = vmul.f32 %v984, 2.1237322e-06
    %v986 = vadd.f32 %v985, 0.00028619796
    %v987 = vmul.f32 %v984, %v986
    %v988 = vadd.f32 %v987, 0.0036580483
    %v989 = vmul.f32 %v984, %v988
    %v990 = vadd.f32 %v989, 0.05243302
    %v991 = vmul.f32 %v984, %v990
    %v992 = vadd.f32 %v991, 0.18741608
    %v993 = vmul.f32 %v984, %v992
    %v994 = vadd.f32 %v993, 1.1283791
    %v995 = vmul.f32 %v942, %v994
    %v996 = vmul.f32 %v984, 3.8918573e-05
    %v997 = vadd.f32 %v996, 0.001143296
    %v998 = vmul.f32 %v984, %v997
    %v999 = vadd.f32 %v998, 0.014752088
    %v1000 = vmul.f32 %v984, %v999
    %v1001 = vadd.f32 %v1000, 0.112945676
    %v1002 = vmul.f32 %v984, %v1001
    %v1003 = vadd.f32 %v1002, 0.4994258
    %v1004 = vmul.f32 %v984, %v1003
    %v1005 = vadd.f32 %v1004, 1.0
    %v1006 = vrcp.pop %v1005
    %v1007 = vmul.f32 %v1005, %v1006
    %v1008 = vsub.f32 1.0, %v1007
    %v1009 = vmul.f32 %v1006, %v1008
    %v1010 = vadd.f32 %v1006, %v1009
    %vm1011 = vweird.f32 %v1005
    %vm1012 = vweird.f32 %v1006
    %vm1013 = vmor %vm1011, %vm1012
    %v1014 = vsel %vm1013, %v1006, %v1010
    %v1015 = vand.u32 2147483647, %v1005
    %vm1016 = vcmp.eq.f32.partialorder %v1015, 8.507059e+37
    %v1017 = vand.u32 %v1005, 2147483648
    %v1018 = vor.u32 1.1754944e-38, %v1017
    %v1019 = vsel %vm1016, %v1018, %v1014
    %v1020 = vmul.f32 %v995, %v1019
    %v1021 = vmin.f32 %v1020, 1.0
    %v1022 = vmax.f32 %v1021, -1.0
    %v1023 = vadd.f32 %v982, 1.0
    %v1024 = vadd.f32 %v1022, 1.0
    %v1025 = vmul.f32 %v932, %v1023
    %v1026 = vmul.f32 %v933, %v1024
    %v1027 = vpack.c.bf16 %v1026, %v1025
    %v1028 = vld [vmem:[%s8] sm:$0xf]
    %v1029 = vld [vmem:[%s8 + $0x4] sm:$0xf]
    %v1030 = vld [vmem:[%s8 + $0x8] sm:$0xf]
    %v1031 = vld [vmem:[%s8 + $0xc] sm:$0xf]
    %v1032 = vld [vmem:[%s8 + $0x10] sm:$0xf]
    %v1033 = vld [vmem:[%s8 + $0x14] sm:$0xf]
    %v1034 = vld [vmem:[%s8 + $0x18] sm:$0xf]
    %v1035 = vld [vmem:[%s8 + $0x1c] sm:$0xf]
    %v1036 = vld [vmem:[%s9] sm:$0x1]
    %v1038 = vperm.slane %v1036, 0
    %v1048 = vunpack.c.l.b16 %v1028
    %v1049 = vunpack.c.l.b16 %v1029
    %v1050 = vunpack.c.l.b16 %v1030
    %v1051 = vunpack.c.l.b16 %v1031
    %v1052 = vunpack.c.l.b16 %v1032
    %v1053 = vunpack.c.l.b16 %v1033
    %v1054 = vunpack.c.l.b16 %v1034
    %v1055 = vunpack.c.l.b16 %v1035
    %v1056 = vpack.c.b16 %v1049, %v1048
    %v1057 = vpack.c.b16 %v1051, %v1050
    %v1058 = vpack.c.b16 %v1053, %v1052
    %v1059 = vpack.c.b16 %v1055, %v1054
    %vm1064 = vcmask 523264
    %v1066 = vsel %vm1064, %v1027, 0
    %1068 = vmatpush.bf16.msra.mxu0 0
    %1069 = vmatpush.bf16.msra.mxu0 0
    %1070 = vmatpush.bf16.msra.mxu0 0
    %1071 = vmatpush.bf16.msra.mxu0 0
    %1072 = vmatpush.bf16.msra.mxu0 %v1059
    %1073 = vmatpush.bf16.msra.mxu0 %v1058
    %1074 = vmatpush.bf16.msra.mxu0 %v1057
    %1075 = vmatpush.bf16.msra.mxu0 %v1056
    %1076 = vmatmul.bf16.gmra.mxu0 %v1066
    %v1077 = vpop.f32.mrf.mxu0
    %v1078 = vadd.f32 %v1038, %v1077
    %v1079 = vpop.f32.mrf.mxu0
    %v1080 = vadd.f32 %v1038, %v1079
    %1081 = vdwg.mxu0
    %v1082 = vadd.f32 %v1078, %v892
    %v1083 = vadd.f32 %v1080, %v893
    %v1084 = vsel %vm144, %v1082, 0.0
    %1085 = vadd.xlane.f32.xlu0 %v1084
    %v1086 = vpop.xlane.xlu0 %1085
    %v1087 = vsel %vm144, %v1083, 0.0
    %1088 = vadd.xlane.f32.xlu0 %v1087
    %v1089 = vpop.xlane.xlu0 %1088
    %v1090 = vmul.f32 %v1086, %v843
    %v1091 = vmul.f32 %v1089, %v843
    %v1092 = vsub.f32 %v1082, %v1090
    %v1093 = vsub.f32 %v1083, %v1091
    %v1094 = vmul.f32 %v1092, %v1092
    %v1095 = vmul.f32 %v1093, %v1093
    %v1096 = vsel %vm144, %v1094, 0.0
    %1097 = vadd.xlane.f32.xlu0 %v1096
    %v1098 = vpop.xlane.xlu0 %1097
    %v1099 = vsel %vm144, %v1095, 0.0
    %1100 = vadd.xlane.f32.xlu0 %v1099
    %v1101 = vpop.xlane.xlu0 %1100
    %v1102 = vmul.f32 %v1098, %v843
    %v1103 = vmul.f32 %v1101, %v843
    %v1104 = vadd.f32 %v1102, 1e-05
    %v1105 = vadd.f32 %v1103, 1e-05
    %v1106 = vrsqrt.pop %v1104
    %v1107 = vmul.f32 %v1106, %v1104
    %v1108 = vmul.f32 %v1107, %v1106
    %v1109 = vmul.f32 0.5, %v1108
    %v1110 = vsub.f32 1.5, %v1109
    %v1111 = vmul.f32 %v1106, %v1110
    %vm1112 = vweird.f32 %v1104
    %vm1113 = vweird.f32 %v1106
    %vm1114 = vmor %vm1112, %vm1113
    %v1115 = vsel %vm1114, %v1106, %v1111
    %v1116 = vrsqrt.pop %v1105
    %v1117 = vmul.f32 %v1116, %v1105
    %v1118 = vmul.f32 %v1117, %v1116
    %v1119 = vmul.f32 0.5, %v1118
    %v1120 = vsub.f32 1.5, %v1119
    %v1121 = vmul.f32 %v1116, %v1120
    %vm1122 = vweird.f32 %v1105
    %vm1123 = vweird.f32 %v1116
    %vm1124 = vmor %vm1122, %vm1123
    %v1125 = vsel %vm1124, %v1116, %v1121
    %v1126 = vmul.f32 %v1092, %v1115
    %v1127 = vmul.f32 %v1093, %v1125
    %v1128 = vld [vmem:[%s12] sm:$0x1]
    %v1130 = vperm.slane %v1128, 0
    %v1132 = vmul.f32 %v1126, %v1130
    %v1133 = vmul.f32 %v1127, %v1130
    %v1134 = vld [vmem:[%s13] sm:$0x1]
    %v1136 = vperm.slane %v1134, 0
    %v1138 = vadd.f32 %v1132, %v1136
    %v1139 = vadd.f32 %v1133, %v1136
    %1140 = vst.msk [vmem:[#allocation10] sm:$0xff] %vm144, %v1138
    %1141 = vst.msk [vmem:[#allocation10 + $0x8] sm:$0xff] %vm144, %v1139
    // Predicated region
    $region74: #{tpu_custom_call.1} parent=1 // pred_check
      _
    $region75: #{tpu_custom_call.1} parent=1 // pred_check_branch
      %1143 = sbr.rel (0) target = $region77
    $region76: #{tpu_custom_call.1} parent=1 // pred_region
      %1145 = vsyncadd [#allocation4], 0
      %s1146 = sshll.u32 [#allocation10], 4
      %s1147 = int_to_ptr.vmem [resolvable:$true] %s1146
      %s1148 = sshll.u32 %s14, 4
      %s1149 = int_to_ptr.hbm [resolvable:$true] %s1148
      %1154 = dma.vmem_to_hbm [thread:$0]  %s1147, 256, %s1149, [#allocation4], 128, 128, 8
    $region77: #{tpu_custom_call.1} parent=1 // pred_fallthru
      _
    // Predicated region
    $region78: #{tpu_custom_call.1} parent=1 // pred_check
      _
    $region79: #{tpu_custom_call.1} parent=1 // pred_check_branch
      %1156 = sbr.rel (0) target = $region81
    $region80: #{tpu_custom_call.1} parent=1 // pred_region
      %1158 = dma.done [#allocation4], 256
    $region81: #{tpu_custom_call.1} parent=1 // pred_fallthru
      _
    %1159 = vsyncpa [#allocation3], 1
    %1160 = vsyncpa [#allocation6], 1
    %1161 = vsyncpa [#allocation9], 1
    %1162 = vsyncpa [#allocation4], 1

</llo_original>
